<compile_context>
chip_gen: v5e
topology: v5e:2x2
jax: 0.10.0
libtpu: 0.0.40
codegen_flags: <defaults>
</compile_context>

<pallas_src>
import math
from functools import partial

import jax
import jax.numpy as jnp
from jax.experimental import pallas as pl
from jax.experimental.pallas import tpu as pltpu

_EPS = 1e-5
_LANE = 128  # lane width: hidden feature dims padded to a multiple of this


def _round_up(n, m):
    return (n + m - 1) // m * m


# ---------------- fused kernel (whole MLP in one body) ----------------

def _make_mlp_kernel(num_hidden, has_out):
    """Kernel factory: refs = [x, w_0..w_{L-1}, b_0..b_{L-1}, (w_out, b_out), out]."""

    def kernel(*refs):
        x_ref = refs[0]
        w_refs = refs[1:1 + num_hidden]
        b_refs = refs[1 + num_hidden:1 + 2 * num_hidden]
        pos = 1 + 2 * num_hidden
        if has_out:
            wout_ref, bout_ref, o_ref = refs[pos], refs[pos + 1], refs[pos + 2]
        else:
            o_ref = refs[pos]

        h = x_ref[...].astype(jnp.float32)          # activations stay in vregs/VMEM
        # TODO(synk): for deep MLPs with uniform widths, switch this static unroll to a
        # lax.fori_loop over a stacked weight tensor to bound live ranges.
        for l in range(num_hidden):
            h = jnp.dot(h, w_refs[l][...].astype(jnp.float32),
                        preferred_element_type=jnp.float32)
            h = jnp.maximum(h + b_refs[l][...], 0.0)   # BN folded; Dropout = identity (eval)

        if has_out:
            # final D->1 projection: VPU multiply + lane reduce (MXU idle in epilogue;
            # output bytes are tiny, masked (TM,1) store is acceptable).
            out = jnp.sum(h * wout_ref[...], axis=-1, keepdims=True) + bout_ref[...]
            o_ref[...] = out.astype(o_ref.dtype)
        else:
            o_ref[...] = h.astype(o_ref.dtype)

    return kernel


# ---------------- parameter setup (deterministic, synthetic) ----------------

def init_mlp_params(key, input_dim, embed_dims, output_layer=True, dtype=jnp.float32):
    """Raw (unfolded) parameters mirroring the PyTorch module."""
    hidden = []
    d_in = input_dim
    for d_out in embed_dims:
        key, kw, kb, kg, kbeta, km, kv = jax.random.split(key, 7)
        bound = 1.0 / math.sqrt(d_in)
        hidden.append(dict(
            w=jax.random.uniform(kw, (d_in, d_out), dtype, -bound, bound),   # (in, out)
            b=jax.random.uniform(kb, (d_out,), dtype, -bound, bound),
            gamma=jax.random.uniform(kg, (d_out,), dtype, 0.5, 1.5),
            beta=jax.random.normal(kbeta, (d_out,), dtype) * 0.1,
            mean=jax.random.normal(km, (d_out,), dtype) * 0.1,
            var=jax.random.uniform(kv, (d_out,), dtype, 0.5, 1.5),
        ))
        d_in = d_out
    out = None
    if output_layer:
        key, kw, kb = jax.random.split(key, 3)
        bound = 1.0 / math.sqrt(d_in)
        out = dict(w=jax.random.uniform(kw, (d_in, 1), dtype, -bound, bound),
                   b=jax.random.uniform(kb, (1,), dtype, -bound, bound))
    return dict(hidden=hidden, out=out,
                input_dim=input_dim, embed_dims=tuple(embed_dims))


def fold_and_pad(params, lane=_LANE, weight_dtype=jnp.float32):
    """Fold eval-mode BN into each Linear and zero-pad each layer to its OWN rounded
    output width (per-layer padding, not a global max).  Padded output columns get
    weight 0 / bias 0 -> ReLU -> 0, so padding propagates cleanly to the next layer.
    The first layer keeps the true input_dim on its contraction axis, so x never has
    to be feature-padded in HBM."""
    hidden = params["hidden"]
    assert len(hidden) >= 1, "fused kernel expects at least one hidden layer"
    p_out = [_round_up(d, lane) for d in params["embed_dims"]]

    ws, bs = [], []
    for l, layer in enumerate(hidden):
        scale = layer["gamma"] / jnp.sqrt(layer["var"] + _EPS)
        shift = layer["beta"] - layer["mean"] * scale
        w_f = layer["w"].astype(jnp.float32) * scale[None, :]       # fold BN into columns
        b_f = layer["b"].astype(jnp.float32) * scale + shift
        d_in, d_out = layer["w"].shape
        P_in = d_in if l == 0 else p_out[l - 1]
        P_out = p_out[l]
        ws.append(jnp.zeros((P_in, P_out), jnp.float32)
                  .at[:d_in, :d_out].set(w_f).astype(weight_dtype))
        bs.append(jnp.zeros((1, P_out), jnp.float32).at[0, :d_out].set(b_f))

    fused = dict(ws=ws, bs=bs, out_dim=params["embed_dims"][-1],
                 w_out=None, b_out=None)
    if params["out"] is not None:
        d_in = params["out"]["w"].shape[0]
        fused["w_out"] = (jnp.zeros((1, p_out[-1]), jnp.float32)
                          .at[0, :d_in].set(params["out"]["w"][:, 0].astype(jnp.float32)))
        fused["b_out"] = params["out"]["b"].reshape(1, 1).astype(jnp.float32)
    return fused


# ---------------- tiling heuristics ----------------

def _choose_tm(B, cap=512):
    """Batch tile: multiple of 8 (f32 sublanes), <= cap, ~B/2 target so the 'parallel'
    batch axis has >= 2 grid steps (keeps both v7x TensorCores busy), and a small
    score balancing batch-padding waste against per-grid-step overhead."""
    target = max(8, min(cap, _round_up((B + 1) // 2, 8)))
    cands = []
    t = target
    while True:
        cands.append(t)
        if t == 8:
            break
        t = max(8, _round_up(t // 2, 8))

    def score(tm):
        b_pad = _round_up(B, tm)
        return b_pad + (b_pad // tm) * 8   # padded rows + ~per-step overhead (rows-equiv)

    return min(cands, key=lambda tm: (score(tm), -tm))


# ---------------- forward (single pallas_call) ----------------

def mlp_forward(fused, x, *, use_buffered=True, tm_cap=512):
    B, D = x.shape
    ws, bs = fused["ws"], fused["bs"]
    L = len(ws)
    assert ws[0].shape[0] == D, "first-layer weight must contract over input_dim"

    TM = _choose_tm(B, tm_cap)
    B_pad = _round_up(B, TM)
    xf = x.astype(jnp.float32)
    if B_pad != B:
        xf = jnp.pad(xf, ((0, B_pad - B), (0, 0)))   # pad batch dim only (no feature pad)

    grid = (B_pad // TM,)

    def const_spec(shape):
        # Weights/biases: constant block index across the batch grid.  Single-buffer them
        # (no need to double-buffer an operand that never changes) -> halves their VMEM.
        kw = {"pipeline_mode": pl.Buffered(1)} if use_buffered else {}
        return pl.BlockSpec(shape, lambda i, n=len(shape): (0,) * n, **kw)

    in_specs = [pl.BlockSpec((TM, D), lambda i: (i, 0))]        # last dim == full extent
    in_specs += [const_spec(w.shape) for w in ws]
    in_specs += [const_spec(b.shape) for b in bs]
    operands = [xf, *ws, *bs]

    has_out = fused["w_out"] is not None
    flops = 2 * B_pad * sum(w.shape[0] * w.shape[1] for w in ws)
    bytes_accessed = (xf.size * xf.dtype.itemsize
                      + sum(w.size * w.dtype.itemsize for w in ws)
                      + sum(b.size * b.dtype.itemsize for b in bs))

    if has_out:
        in_specs += [const_spec(fused["w_out"].shape), const_spec(fused["b_out"].shape)]
        operands += [fused["w_out"], fused["b_out"]]
        out_shape = jax.ShapeDtypeStruct((B_pad, 1), x.dtype)
        out_spec = pl.BlockSpec((TM, 1), lambda i: (i, 0))
        flops += 2 * B_pad * ws[-1].shape[1]
        bytes_accessed += fused["w_out"].size * 4 + 4 + B_pad * x.dtype.itemsize
    else:
        P_last = ws[-1].shape[1]
        out_shape = jax.ShapeDtypeStruct((B_pad, P_last), x.dtype)
        out_spec = pl.BlockSpec((TM, P_last), lambda i: (i, 0))
        bytes_accessed += B_pad * P_last * x.dtype.itemsize

    cparams = pltpu.CompilerParams(
        dimension_semantics=("parallel",),          # batch tiles shard across TCs (v7x)
        vmem_limit_bytes=48 * 1024 * 1024,          # explicit budget, safe on v7x's 64 MiB
    )

    out = pl.pallas_call(
        _make_mlp_kernel(L, has_out),
        out_shape=out_shape,
        grid=grid,
        in_specs=in_specs,
        out_specs=out_spec,
        compiler_params=cparams,
        cost_estimate=pl.CostEstimate(flops=flops, transcendentals=0,
                                      bytes_accessed=bytes_accessed),
    )(*operands)

    if has_out:
        return out[:B]
    return out[:B, :fused["out_dim"]]


def build_forward(fused, use_buffered=True):
    return jax.jit(partial(mlp_forward, fused, use_buffered=use_buffered))


# ---------------- pure-JAX reference (unfolded params) ----------------

def mlp_reference(params, x):
    h = x.astype(jnp.float32)
    for layer in params["hidden"]:
        h = jnp.dot(h, layer["w"], precision=jax.lax.Precision.HIGHEST) + layer["b"]
        h = (h - layer["mean"]) / jnp.sqrt(layer["var"] + _EPS) * layer["gamma"] + layer["beta"]
        h = jnp.maximum(h, 0.0)
        # Dropout: identity in eval mode
    if params["out"] is not None:
        h = jnp.dot(h, params["out"]["w"],
                    precision=jax.lax.Precision.HIGHEST) + params["out"]["b"]
    return h


if __name__ == "__main__":
    key = jax.random.PRNGKey(0)
    batch, input_dim = 8, 32
    embed_dims = (64, 32)
    dropout = 0.2  # eval mode -> identity

    kx, kp = jax.random.split(key)
    x = jax.random.normal(kx, (batch, input_dim), jnp.float32)
    params = init_mlp_params(kp, input_dim, embed_dims, output_layer=True)
    fused = fold_and_pad(params)

    # Prefer single-buffered constant weight operands; fall back cleanly if the installed
    # JAX / Mosaic rejects pipeline_mode on BlockSpec.
    try:
        fwd = build_forward(fused, use_buffered=True)
        out = jax.block_until_ready(fwd(x))
    except Exception:
        fwd = build_forward(fused, use_buffered=False)
        out = jax.block_until_ready(fwd(x))

    ref = mlp_reference(params, x)
    assert out.shape == (batch, 1), out.shape
    err = float(jnp.max(jnp.abs(out - ref)))
    assert jnp.allclose(out, ref, atol=2e-4, rtol=2e-4), \
        f"mismatch vs reference, max abs err {err}"

    print("KERNEL_OK")
</pallas_src>

<mosaic_0001>
module attributes {stable_mosaic.version = 11 : i64} {
  func.func @kernel(%arg0: i32, %arg1: memref<8x32xf32, #tpu.memory_space<vmem>>, %arg2: memref<32x128xf32, #tpu.memory_space<vmem>>, %arg3: memref<128x128xf32, #tpu.memory_space<vmem>>, %arg4: memref<1x128xf32, #tpu.memory_space<vmem>>, %arg5: memref<1x128xf32, #tpu.memory_space<vmem>>, %arg6: memref<1x128xf32, #tpu.memory_space<vmem>>, %arg7: memref<1x1xf32, #tpu.memory_space<vmem>>, %arg8: memref<8x1xf32, #tpu.memory_space<vmem>>) attributes {dimension_semantics = [#tpu.dimension_semantics<parallel>], iteration_bounds = array<i64: 1>, scalar_prefetch = 0 : i64, scratch_operands = 0 : i64, tpu.core_type = #tpu.core_type<tc>, window_params = [{transform_indices = @transform_0, window_bounds = array<i64: 8, 32>}, {pipeline_mode = #tpu.pipeline_mode<synchronous>, transform_indices = @transform_1, window_bounds = array<i64: 32, 128>}, {pipeline_mode = #tpu.pipeline_mode<synchronous>, transform_indices = @transform_2, window_bounds = array<i64: 128, 128>}, {pipeline_mode = #tpu.pipeline_mode<synchronous>, transform_indices = @transform_3, window_bounds = array<i64: 1, 128>}, {pipeline_mode = #tpu.pipeline_mode<synchronous>, transform_indices = @transform_4, window_bounds = array<i64: 1, 128>}, {pipeline_mode = #tpu.pipeline_mode<synchronous>, transform_indices = @transform_5, window_bounds = array<i64: 1, 128>}, {pipeline_mode = #tpu.pipeline_mode<synchronous>, transform_indices = @transform_6, window_bounds = array<i64: 1, 1>}, {transform_indices = @transform_7, window_bounds = array<i64: 8, 1>}]} {
    %c0 = arith.constant 0 : index
    %c0_0 = arith.constant 0 : index
    %0 = vector.load %arg1[%c0, %c0_0] : memref<8x32xf32, #tpu.memory_space<vmem>>, vector<8x32xf32>
    %c0_1 = arith.constant 0 : index
    %c0_2 = arith.constant 0 : index
    %1 = vector.load %arg2[%c0_1, %c0_2] : memref<32x128xf32, #tpu.memory_space<vmem>>, vector<32x128xf32>
    %cst = arith.constant dense<0.000000e+00> : vector<8x128xf32>
    %2 = tpu.matmul %0, %1, %cst {dimension_numbers = #tpu.dot_dimension_numbers<[1], [0], [0], [1], [0, 0, 1, 1], [], []>} : vector<8x32xf32>, vector<32x128xf32>, vector<8x128xf32> -> vector<8x128xf32>
    %c0_3 = arith.constant 0 : index
    %c0_4 = arith.constant 0 : index
    %3 = vector.load %arg4[%c0_3, %c0_4] : memref<1x128xf32, #tpu.memory_space<vmem>>, vector<1x128xf32>
    %4 = vector.broadcast %3 : vector<1x128xf32> to vector<8x128xf32>
    %5 = arith.addf %2, %4 : vector<8x128xf32>
    %cst_5 = arith.constant 0.000000e+00 : f32
    %6 = vector.broadcast %cst_5 : f32 to vector<8x128xf32>
    %7 = arith.maximumf %5, %6 : vector<8x128xf32>
    %c0_6 = arith.constant 0 : index
    %c0_7 = arith.constant 0 : index
    %8 = vector.load %arg3[%c0_6, %c0_7] : memref<128x128xf32, #tpu.memory_space<vmem>>, vector<128x128xf32>
    %cst_8 = arith.constant dense<0.000000e+00> : vector<8x128xf32>
    %9 = tpu.matmul %7, %8, %cst_8 {dimension_numbers = #tpu.dot_dimension_numbers<[1], [0], [0], [1], [0, 0, 1, 1], [], []>} : vector<8x128xf32>, vector<128x128xf32>, vector<8x128xf32> -> vector<8x128xf32>
    %c0_9 = arith.constant 0 : index
    %c0_10 = arith.constant 0 : index
    %10 = vector.load %arg5[%c0_9, %c0_10] : memref<1x128xf32, #tpu.memory_space<vmem>>, vector<1x128xf32>
    %11 = vector.broadcast %10 : vector<1x128xf32> to vector<8x128xf32>
    %12 = arith.addf %9, %11 : vector<8x128xf32>
    %cst_11 = arith.constant 0.000000e+00 : f32
    %13 = vector.broadcast %cst_11 : f32 to vector<8x128xf32>
    %14 = arith.maximumf %12, %13 : vector<8x128xf32>
    %c0_12 = arith.constant 0 : index
    %c0_13 = arith.constant 0 : index
    %15 = vector.load %arg6[%c0_12, %c0_13] : memref<1x128xf32, #tpu.memory_space<vmem>>, vector<1x128xf32>
    %16 = vector.broadcast %15 : vector<1x128xf32> to vector<8x128xf32>
    %17 = arith.mulf %14, %16 : vector<8x128xf32>
    %cst_14 = arith.constant dense<0.000000e+00> : vector<8xf32>
    %18 = vector.multi_reduction <add>, %17, %cst_14 [1] : vector<8x128xf32> to vector<8xf32>
    %19 = vector.shape_cast %18 : vector<8xf32> to vector<8x1xf32>
    %c0_15 = arith.constant 0 : index
    %c0_16 = arith.constant 0 : index
    %20 = vector.load %arg7[%c0_15, %c0_16] : memref<1x1xf32, #tpu.memory_space<vmem>>, vector<1x1xf32>
    %21 = vector.broadcast %20 : vector<1x1xf32> to vector<8x1xf32>
    %22 = arith.addf %19, %21 : vector<8x1xf32>
    %c0_17 = arith.constant 0 : index
    %c0_18 = arith.constant 0 : index
    %23 = vector.load %arg8[%c0_17, %c0_18] : memref<8x1xf32, #tpu.memory_space<vmem>>, vector<8x1xf32>
    tpu.vector_store %arg8[%c0_17, %c0_18], %22 {strides = array<i32>} : memref<8x1xf32, #tpu.memory_space<vmem>>, vector<8x1xf32>,
    return
  }
  func.func @transform_0(%arg0: i32) -> (i32, i32) {
    %c0_i32 = arith.constant 0 : i32
    %c0_i32_0 = arith.constant 0 : i32
    return %arg0, %c0_i32 : i32, i32
  }
  func.func @transform_1(%arg0: i32) -> (i32, i32) {
    %c0_i32 = arith.constant 0 : i32
    %c0_i32_0 = arith.constant 0 : i32
    %c0_i32_1 = arith.constant 0 : i32
    return %c0_i32, %c0_i32_0 : i32, i32
  }
  func.func @transform_2(%arg0: i32) -> (i32, i32) {
    %c0_i32 = arith.constant 0 : i32
    %c0_i32_0 = arith.constant 0 : i32
    %c0_i32_1 = arith.constant 0 : i32
    return %c0_i32, %c0_i32_0 : i32, i32
  }
  func.func @transform_3(%arg0: i32) -> (i32, i32) {
    %c0_i32 = arith.constant 0 : i32
    %c0_i32_0 = arith.constant 0 : i32
    %c0_i32_1 = arith.constant 0 : i32
    return %c0_i32, %c0_i32_0 : i32, i32
  }
  func.func @transform_4(%arg0: i32) -> (i32, i32) {
    %c0_i32 = arith.constant 0 : i32
    %c0_i32_0 = arith.constant 0 : i32
    %c0_i32_1 = arith.constant 0 : i32
    return %c0_i32, %c0_i32_0 : i32, i32
  }
  func.func @transform_5(%arg0: i32) -> (i32, i32) {
    %c0_i32 = arith.constant 0 : i32
    %c0_i32_0 = arith.constant 0 : i32
    %c0_i32_1 = arith.constant 0 : i32
    return %c0_i32, %c0_i32_0 : i32, i32
  }
  func.func @transform_6(%arg0: i32) -> (i32, i32) {
    %c0_i32 = arith.constant 0 : i32
    %c0_i32_0 = arith.constant 0 : i32
    %c0_i32_1 = arith.constant 0 : i32
    return %c0_i32, %c0_i32_0 : i32, i32
  }
  func.func @transform_7(%arg0: i32) -> (i32, i32) {
    %c0_i32 = arith.constant 0 : i32
    %c0_i32_0 = arith.constant 0 : i32
    return %arg0, %c0_i32 : i32, i32
  }
}

module attributes {stable_mosaic.version = 11 : i64} {
  func.func @kernel(%arg0: i32, %arg1: memref<8x32xf32, #tpu.memory_space<vmem>>, %arg2: memref<32x128xf32, #tpu.memory_space<vmem>>, %arg3: memref<128x128xf32, #tpu.memory_space<vmem>>, %arg4: memref<1x128xf32, #tpu.memory_space<vmem>>, %arg5: memref<1x128xf32, #tpu.memory_space<vmem>>, %arg6: memref<1x128xf32, #tpu.memory_space<vmem>>, %arg7: memref<1x1xf32, #tpu.memory_space<vmem>>, %arg8: memref<8x1xf32, #tpu.memory_space<vmem>>) attributes {dimension_semantics = [#tpu.dimension_semantics<parallel>], iteration_bounds = array<i64: 1>, scalar_prefetch = 0 : i64, scratch_operands = 0 : i64, tpu.core_type = #tpu.core_type<tc>, window_params = [{transform_indices = @transform_0, window_bounds = array<i64: 8, 32>}, {pipeline_mode = #tpu.pipeline_mode<synchronous>, transform_indices = @transform_1, window_bounds = array<i64: 32, 128>}, {pipeline_mode = #tpu.pipeline_mode<synchronous>, transform_indices = @transform_2, window_bounds = array<i64: 128, 128>}, {pipeline_mode = #tpu.pipeline_mode<synchronous>, transform_indices = @transform_3, window_bounds = array<i64: 1, 128>}, {pipeline_mode = #tpu.pipeline_mode<synchronous>, transform_indices = @transform_4, window_bounds = array<i64: 1, 128>}, {pipeline_mode = #tpu.pipeline_mode<synchronous>, transform_indices = @transform_5, window_bounds = array<i64: 1, 128>}, {pipeline_mode = #tpu.pipeline_mode<synchronous>, transform_indices = @transform_6, window_bounds = array<i64: 1, 1>}, {transform_indices = @transform_7, window_bounds = array<i64: 8, 1>}]} {
    %c0 = arith.constant 0 : index
    %c0_0 = arith.constant 0 : index
    %0 = vector.load %arg1[%c0, %c0_0] : memref<8x32xf32, #tpu.memory_space<vmem>>, vector<8x32xf32>
    %c0_1 = arith.constant 0 : index
    %c0_2 = arith.constant 0 : index
    %1 = vector.load %arg2[%c0_1, %c0_2] : memref<32x128xf32, #tpu.memory_space<vmem>>, vector<32x128xf32>
    %cst = arith.constant dense<0.000000e+00> : vector<8x128xf32>
    %2 = tpu.matmul %0, %1, %cst {dimension_numbers = #tpu.dot_dimension_numbers<[1], [0], [0], [1], [0, 0, 1, 1], [], []>} : vector<8x32xf32>, vector<32x128xf32>, vector<8x128xf32> -> vector<8x128xf32>
    %c0_3 = arith.constant 0 : index
    %c0_4 = arith.constant 0 : index
    %3 = vector.load %arg4[%c0_3, %c0_4] : memref<1x128xf32, #tpu.memory_space<vmem>>, vector<1x128xf32>
    %4 = vector.broadcast %3 : vector<1x128xf32> to vector<8x128xf32>
    %5 = arith.addf %2, %4 : vector<8x128xf32>
    %cst_5 = arith.constant 0.000000e+00 : f32
    %6 = vector.broadcast %cst_5 : f32 to vector<8x128xf32>
    %7 = arith.maximumf %5, %6 : vector<8x128xf32>
    %c0_6 = arith.constant 0 : index
    %c0_7 = arith.constant 0 : index
    %8 = vector.load %arg3[%c0_6, %c0_7] : memref<128x128xf32, #tpu.memory_space<vmem>>, vector<128x128xf32>
    %cst_8 = arith.constant dense<0.000000e+00> : vector<8x128xf32>
    %9 = tpu.matmul %7, %8, %cst_8 {dimension_numbers = #tpu.dot_dimension_numbers<[1], [0], [0], [1], [0, 0, 1, 1], [], []>} : vector<8x128xf32>, vector<128x128xf32>, vector<8x128xf32> -> vector<8x128xf32>
    %c0_9 = arith.constant 0 : index
    %c0_10 = arith.constant 0 : index
    %10 = vector.load %arg5[%c0_9, %c0_10] : memref<1x128xf32, #tpu.memory_space<vmem>>, vector<1x128xf32>
    %11 = vector.broadcast %10 : vector<1x128xf32> to vector<8x128xf32>
    %12 = arith.addf %9, %11 : vector<8x128xf32>
    %cst_11 = arith.constant 0.000000e+00 : f32
    %13 = vector.broadcast %cst_11 : f32 to vector<8x128xf32>
    %14 = arith.maximumf %12, %13 : vector<8x128xf32>
    %c0_12 = arith.constant 0 : index
    %c0_13 = arith.constant 0 : index
    %15 = vector.load %arg6[%c0_12, %c0_13] : memref<1x128xf32, #tpu.memory_space<vmem>>, vector<1x128xf32>
    %16 = vector.broadcast %15 : vector<1x128xf32> to vector<8x128xf32>
    %17 = arith.mulf %14, %16 : vector<8x128xf32>
    %cst_14 = arith.constant dense<0.000000e+00> : vector<8xf32>
    %18 = vector.multi_reduction <add>, %17, %cst_14 [1] : vector<8x128xf32> to vector<8xf32>
    %19 = vector.shape_cast %18 : vector<8xf32> to vector<8x1xf32>
    %c0_15 = arith.constant 0 : index
    %c0_16 = arith.constant 0 : index
    %20 = vector.load %arg7[%c0_15, %c0_16] : memref<1x1xf32, #tpu.memory_space<vmem>>, vector<1x1xf32>
    %21 = vector.broadcast %20 : vector<1x1xf32> to vector<8x1xf32>
    %22 = arith.addf %19, %21 : vector<8x1xf32>
    %c0_17 = arith.constant 0 : index
    %c0_18 = arith.constant 0 : index
    %23 = vector.load %arg8[%c0_17, %c0_18] : memref<8x1xf32, #tpu.memory_space<vmem>>, vector<8x1xf32>
    tpu.vector_store %arg8[%c0_17, %c0_18], %22 {strides = array<i32>} : memref<8x1xf32, #tpu.memory_space<vmem>>, vector<8x1xf32>,
    return
  }
  func.func @transform_0(%arg0: i32) -> (i32, i32) {
    %c0_i32 = arith.constant 0 : i32
    %c0_i32_0 = arith.constant 0 : i32
    return %arg0, %c0_i32 : i32, i32
  }
  func.func @transform_1(%arg0: i32) -> (i32, i32) {
    %c0_i32 = arith.constant 0 : i32
    %c0_i32_0 = arith.constant 0 : i32
    %c0_i32_1 = arith.constant 0 : i32
    return %c0_i32, %c0_i32_0 : i32, i32
  }
  func.func @transform_2(%arg0: i32) -> (i32, i32) {
    %c0_i32 = arith.constant 0 : i32
    %c0_i32_0 = arith.constant 0 : i32
    %c0_i32_1 = arith.constant 0 : i32
    return %c0_i32, %c0_i32_0 : i32, i32
  }
  func.func @transform_3(%arg0: i32) -> (i32, i32) {
    %c0_i32 = arith.constant 0 : i32
    %c0_i32_0 = arith.constant 0 : i32
    %c0_i32_1 = arith.constant 0 : i32
    return %c0_i32, %c0_i32_0 : i32, i32
  }
  func.func @transform_4(%arg0: i32) -> (i32, i32) {
    %c0_i32 = arith.constant 0 : i32
    %c0_i32_0 = arith.constant 0 : i32
    %c0_i32_1 = arith.constant 0 : i32
    return %c0_i32, %c0_i32_0 : i32, i32
  }
  func.func @transform_5(%arg0: i32) -> (i32, i32) {
    %c0_i32 = arith.constant 0 : i32
    %c0_i32_0 = arith.constant 0 : i32
    %c0_i32_1 = arith.constant 0 : i32
    return %c0_i32, %c0_i32_0 : i32, i32
  }
  func.func @transform_6(%arg0: i32) -> (i32, i32) {
    %c0_i32 = arith.constant 0 : i32
    %c0_i32_0 = arith.constant 0 : i32
    %c0_i32_1 = arith.constant 0 : i32
    return %c0_i32, %c0_i32_0 : i32, i32
  }
  func.func @transform_7(%arg0: i32) -> (i32, i32) {
    %c0_i32 = arith.constant 0 : i32
    %c0_i32_0 = arith.constant 0 : i32
    return %arg0, %c0_i32 : i32, i32
  }
}

</mosaic_0001>

<llo_original>
// kernel: mlp_forward.1
$region0: #{mlp_forward.1}
  #allocation0 [shape = 'u32[]', space=smem, size = 0x4, offset = 0x4, fixed_abs, tag = 'smem constant byte address 0x4 - core index']
  #allocation1 [shape = 'u32[72,128]{1,0:T(1,128)}', space=vmem, size = 0x9000, scoped, tag = 'internal scratch']
  #allocation2 [shape = 'f32[1,1]{1,0:T(1,128)S(1)}', space=vmem, size = 0x200, scoped, tag = 'scoped memory for mlp_forward.1']
  %s0 = inlined_call_operand.hbm [shape: f32[8,32], index: 0, kind: input, shape index: {}]
  %s1 = inlined_call_operand.hbm [shape: f32[32,128], index: 1, kind: input, shape index: {}]
  %s2 = inlined_call_operand.hbm [shape: f32[128,128], index: 2, kind: input, shape index: {}]
  %s3 = inlined_call_operand.hbm [shape: f32[1,128], index: 3, kind: input, shape index: {}]
  %s4 = inlined_call_operand.vmem [shape: f32[1,128], index: 4, kind: input, shape index: {}]
  %s5 = inlined_call_operand.vmem [shape: f32[1,128], index: 5, kind: input, shape index: {}]
  %s6 = inlined_call_operand.<no memory space> [shape: f32[1,1], index: 6, kind: input, shape index: {}]
  %s7 = inlined_call_operand.vmem [shape: f32[8,1], index: 7, kind: output, shape index: {}]
  %s8 = sld [smem:[#allocation0]]
  $region54: #{mlp_forward.1} parent=0
    _
  %s10 = ssub.s32 1, %s8
  %s11 = scalar_select 0, %s10, %s8
  %v12 = vstv %s6
  %13 = vst [vmem:[#allocation2] sm:$0x1] %v12
  $region1: #{mlp_forward.1} parent=0
    #allocation3 [shape = 'u8[4096]{0}', space=vmem, size = 0x1000, scoped, tag = 'input window, operand 0, single buffered']
    #allocation4 [shape = 's32[1]{0}', space=sflag, size = 0x4, scoped, tag = 'scoped memory for mlp_forward.1']
    #allocation5 [shape = 'u8[16384]{0}', space=vmem, size = 0x4000, scoped, tag = 'input window, operand 1, single buffered']
    #allocation6 [shape = 's32[1]{0}', space=sflag, size = 0x4, scoped, tag = 'scoped memory for mlp_forward.1']
    #allocation7 [shape = 'u8[65536]{0}', space=vmem, size = 0x10000, scoped, tag = 'input window, operand 2, single buffered']
    #allocation8 [shape = 'u8[512]{0}', space=vmem, size = 0x400, scoped, tag = 'input window, operand 3, single buffered']
    #allocation9 [shape = 's32[1]{0}', space=sflag, size = 0x4, scoped, tag = 'scoped memory for mlp_forward.1']
    %14 = vsyncpa [#allocation4], 0
    %15 = vsyncpa [#allocation6], 0
    %16 = vsyncpa [#allocation9], 0
    // Predicated region
    $region2: #{mlp_forward.1} parent=1 // pred_check
      _
    $region3: #{mlp_forward.1} parent=1 // pred_check_branch
      %18 = sbr.rel (0) target = $region5
    $region4: #{mlp_forward.1} parent=1 // pred_region
      %20 = vsyncadd [#allocation4], 0
      %s22 = sshll.u32 %s0, 4
      %s23 = int_to_ptr.hbm [resolvable:$true] %s22
      %s24 = sshll.u32 [#allocation3], 4
      %s25 = int_to_ptr.vmem [resolvable:$true] %s24
      %27 = dma.hbm_to_vmem [thread:$0]  %s23, 128, %s25, [#allocation4]
    $region5: #{mlp_forward.1} parent=1 // pred_fallthru
      _
    // Predicated region
    $region6: #{mlp_forward.1} parent=1 // pred_check
      _
    $region7: #{mlp_forward.1} parent=1 // pred_check_branch
      %29 = sbr.rel (0) target = $region9
    $region8: #{mlp_forward.1} parent=1 // pred_region
      %31 = vsyncadd [#allocation6], 0
      %s32 = sshll.u32 %s1, 4
      %s33 = int_to_ptr.hbm [resolvable:$true] %s32
      %s34 = sshll.u32 [#allocation5], 4
      %s35 = int_to_ptr.vmem [resolvable:$true] %s34
      %40 = dma.hbm_to_vmem [thread:$0]  %s33, 512, %s35, [#allocation6], 128, 128, 8
    $region9: #{mlp_forward.1} parent=1 // pred_fallthru
      _
    // Predicated region
    $region10: #{mlp_forward.1} parent=1 // pred_check
      _
    $region11: #{mlp_forward.1} parent=1 // pred_check_branch
      %42 = sbr.rel (0) target = $region13
    $region12: #{mlp_forward.1} parent=1 // pred_region
      %44 = vsyncadd [#allocation6], 0
      %s45 = sshll.u32 %s2, 4
      %s46 = int_to_ptr.hbm [resolvable:$true] %s45
      %s47 = sshll.u32 [#allocation7], 4
      %s48 = int_to_ptr.vmem [resolvable:$true] %s47
      %53 = dma.hbm_to_vmem [thread:$0]  %s46, 2048, %s48, [#allocation6], 128, 128, 8
    $region13: #{mlp_forward.1} parent=1 // pred_fallthru
      _
    // Predicated region
    $region14: #{mlp_forward.1} parent=1 // pred_check
      _
    $region15: #{mlp_forward.1} parent=1 // pred_check_branch
      %55 = sbr.rel (0) target = $region17
    $region16: #{mlp_forward.1} parent=1 // pred_region
      %57 = vsyncadd [#allocation9], 0
      %s59 = sshll.u32 %s3, 4
      %s60 = int_to_ptr.hbm [resolvable:$true] %s59
      %s61 = sshll.u32 [#allocation8], 4
      %s62 = int_to_ptr.vmem [resolvable:$true] %s61
      %64 = dma.hbm_to_vmem [thread:$0]  %s60, 16, %s62, [#allocation9]
    $region17: #{mlp_forward.1} parent=1 // pred_fallthru
      _
    // Predicated region
    $region18: #{mlp_forward.1} parent=1 // pred_check
      _
    $region19: #{mlp_forward.1} parent=1 // pred_check_branch
      %66 = sbr.rel (0) target = $region21
    $region20: #{mlp_forward.1} parent=1 // pred_region
      _
    $region21: #{mlp_forward.1} parent=1 // pred_fallthru
      _
    // Predicated region
    $region22: #{mlp_forward.1} parent=1 // pred_check
      _
    $region23: #{mlp_forward.1} parent=1 // pred_check_branch
      %68 = sbr.rel (0) target = $region25
    $region24: #{mlp_forward.1} parent=1 // pred_region
      _
    $region25: #{mlp_forward.1} parent=1 // pred_fallthru
      _
    // Predicated region
    $region26: #{mlp_forward.1} parent=1 // pred_check
      _
    $region27: #{mlp_forward.1} parent=1 // pred_check_branch
      %70 = sbr.rel (0) target = $region29
    $region28: #{mlp_forward.1} parent=1 // pred_region
      _
    $region29: #{mlp_forward.1} parent=1 // pred_fallthru
      _
    // Predicated region
    $region30: #{mlp_forward.1} parent=1 // pred_check
      _
    $region31: #{mlp_forward.1} parent=1 // pred_check_branch
      %72 = sbr.rel (0) target = $region33
    $region32: #{mlp_forward.1} parent=1 // pred_region
      %74 = dma.done [#allocation4], 128
    $region33: #{mlp_forward.1} parent=1 // pred_fallthru
      _
    // Predicated region
    $region34: #{mlp_forward.1} parent=1 // pred_check
      _
    $region35: #{mlp_forward.1} parent=1 // pred_check_branch
      %76 = sbr.rel (0) target = $region37
    $region36: #{mlp_forward.1} parent=1 // pred_region
      %78 = dma.done [#allocation6], 512
    $region37: #{mlp_forward.1} parent=1 // pred_fallthru
      _
    // Predicated region
    $region38: #{mlp_forward.1} parent=1 // pred_check
      _
    $region39: #{mlp_forward.1} parent=1 // pred_check_branch
      %80 = sbr.rel (0) target = $region41
    $region40: #{mlp_forward.1} parent=1 // pred_region
      %82 = dma.done [#allocation6], 2048
    $region41: #{mlp_forward.1} parent=1 // pred_fallthru
      _
    // Predicated region
    $region42: #{mlp_forward.1} parent=1 // pred_check
      _
    $region43: #{mlp_forward.1} parent=1 // pred_check_branch
      %84 = sbr.rel (0) target = $region45
    $region44: #{mlp_forward.1} parent=1 // pred_region
      %86 = dma.done [#allocation9], 16
    $region45: #{mlp_forward.1} parent=1 // pred_fallthru
      _
    %v87 = vld [vmem:[#allocation3] sm:$0xff]
    %v88 = vld [vmem:[#allocation5] sm:$0xff]
    %v89 = vld [vmem:[#allocation5 + $0x8] sm:$0xff]
    %v90 = vld [vmem:[#allocation5 + $0x10] sm:$0xff]
    %v91 = vld [vmem:[#allocation5 + $0x18] sm:$0xff]
    %v92 = vld [vmem:[#allocation8] sm:$0x1]
    %v94 = vperm.slane %v92, 0
    %vm96 = vcmask 261120
    %v98 = vsel %vm96, %v87, 0
    %100 = vmatpush.msra.mxu0 0.0
    %101 = vmatpush.msra.mxu0 0.0
    %102 = vmatpush.msra.mxu0 0.0
    %103 = vmatpush.msra.mxu0 0.0
    %104 = vmatpush.msra.mxu0 0.0
    %105 = vmatpush.msra.mxu0 0.0
    %106 = vmatpush.msra.mxu0 0.0
    %107 = vmatpush.msra.mxu0 0.0
    %108 = vmatpush.msra.mxu0 0.0
    %109 = vmatpush.msra.mxu0 0.0
    %110 = vmatpush.msra.mxu0 0.0
    %111 = vmatpush.msra.mxu0 0.0
    %112 = vmatpush.msra.mxu0 %v91
    %113 = vmatpush.msra.mxu0 %v90
    %114 = vmatpush.msra.mxu0 %v89
    %115 = vmatpush.msra.mxu0 %v88
    %116 = vmatmul.f32.gmra.mxu0 %v98
    %v117 = vpop.f32.mrf.mxu0
    %v118 = vadd.f32 %v94, %v117
    %119 = vdwg.mxu0
    %v120 = vmax.f32 %v118, 0.0
    %v121 = vld [vmem:[#allocation7] sm:$0xff]
    %v122 = vld [vmem:[#allocation7 + $0x8] sm:$0xff]
    %v123 = vld [vmem:[#allocation7 + $0x10] sm:$0xff]
    %v124 = vld [vmem:[#allocation7 + $0x18] sm:$0xff]
    %v125 = vld [vmem:[#allocation7 + $0x20] sm:$0xff]
    %v126 = vld [vmem:[#allocation7 + $0x28] sm:$0xff]
    %v127 = vld [vmem:[#allocation7 + $0x30] sm:$0xff]
    %v128 = vld [vmem:[#allocation7 + $0x38] sm:$0xff]
    %v129 = vld [vmem:[#allocation7 + $0x40] sm:$0xff]
    %v130 = vld [vmem:[#allocation7 + $0x48] sm:$0xff]
    %v131 = vld [vmem:[#allocation7 + $0x50] sm:$0xff]
    %v132 = vld [vmem:[#allocation7 + $0x58] sm:$0xff]
    %v133 = vld [vmem:[#allocation7 + $0x60] sm:$0xff]
    %v134 = vld [vmem:[#allocation7 + $0x68] sm:$0xff]
    %v135 = vld [vmem:[#allocation7 + $0x70] sm:$0xff]
    %v136 = vld [vmem:[#allocation7 + $0x78] sm:$0xff]
    %v137 = vld [vmem:[%s4] sm:$0x1]
    %v139 = vperm.slane %v137, 0
    %141 = vmatpush.msra.mxu0 %v136
    %142 = vmatpush.msra.mxu0 %v135
    %143 = vmatpush.msra.mxu0 %v134
    %144 = vmatpush.msra.mxu0 %v133
    %145 = vmatpush.msra.mxu0 %v132
    %146 = vmatpush.msra.mxu0 %v131
    %147 = vmatpush.msra.mxu0 %v130
    %148 = vmatpush.msra.mxu0 %v129
    %149 = vmatpush.msra.mxu0 %v128
    %150 = vmatpush.msra.mxu0 %v127
    %151 = vmatpush.msra.mxu0 %v126
    %152 = vmatpush.msra.mxu0 %v125
    %153 = vmatpush.msra.mxu0 %v124
    %154 = vmatpush.msra.mxu0 %v123
    %155 = vmatpush.msra.mxu0 %v122
    %156 = vmatpush.msra.mxu0 %v121
    %157 = vmatmul.f32.gmra.mxu0 %v120
    %v158 = vpop.f32.mrf.mxu0
    %v159 = vadd.f32 %v139, %v158
    %160 = vdwg.mxu0
    %v161 = vmax.f32 %v159, 0.0
    %v162 = vld [vmem:[%s5] sm:$0x1]
    %v164 = vperm.slane %v162, 0
    %v166 = vmul.f32 %v161, %v164
    %167 = vadd.xlane.f32.xlu0 %v166
    %v168 = vpop.xlane.xlu0 %167
    %v169 = vld [vmem:[#allocation2] sm:$0x1]
    %v171 = vperm.slane %v169, 0
    %v173 = vadd.f32 %v168, %v171
    %vm174 = vcmask 7168
    %175 = vst.msk [vmem:[%s7] sm:$0xff] %vm174, %v173
    // Predicated region
    $region46: #{mlp_forward.1} parent=1 // pred_check
      _
    $region47: #{mlp_forward.1} parent=1 // pred_check_branch
      %177 = sbr.rel (0) target = $region49
    $region48: #{mlp_forward.1} parent=1 // pred_region
      _
    $region49: #{mlp_forward.1} parent=1 // pred_fallthru
      _
    // Predicated region
    $region50: #{mlp_forward.1} parent=1 // pred_check
      _
    $region51: #{mlp_forward.1} parent=1 // pred_check_branch
      %179 = sbr.rel (0) target = $region53
    $region52: #{mlp_forward.1} parent=1 // pred_region
      _
    $region53: #{mlp_forward.1} parent=1 // pred_fallthru
      _
    %180 = vsyncpa [#allocation4], 1
    %181 = vsyncpa [#allocation6], 1
    %182 = vsyncpa [#allocation9], 1

// kernel: mlp_forward.1
$region0: #{mlp_forward.1}
  #allocation0 [shape = 'u32[]', space=smem, size = 0x4, offset = 0x4, fixed_abs, tag = 'smem constant byte address 0x4 - core index']
  #allocation1 [shape = 'u32[72,128]{1,0:T(1,128)}', space=vmem, size = 0x9000, scoped, tag = 'internal scratch']
  #allocation2 [shape = 'f32[1,1]{1,0:T(1,128)S(1)}', space=vmem, size = 0x200, scoped, tag = 'scoped memory for mlp_forward.1']
  %s0 = inlined_call_operand.hbm [shape: f32[8,32], index: 0, kind: input, shape index: {}]
  %s1 = inlined_call_operand.hbm [shape: f32[32,128], index: 1, kind: input, shape index: {}]
  %s2 = inlined_call_operand.hbm [shape: f32[128,128], index: 2, kind: input, shape index: {}]
  %s3 = inlined_call_operand.hbm [shape: f32[1,128], index: 3, kind: input, shape index: {}]
  %s4 = inlined_call_operand.vmem [shape: f32[1,128], index: 4, kind: input, shape index: {}]
  %s5 = inlined_call_operand.vmem [shape: f32[1,128], index: 5, kind: input, shape index: {}]
  %s6 = inlined_call_operand.<no memory space> [shape: f32[1,1], index: 6, kind: input, shape index: {}]
  %s7 = inlined_call_operand.vmem [shape: f32[8,1], index: 7, kind: output, shape index: {}]
  %s8 = sld [smem:[#allocation0]]
  $region54: #{mlp_forward.1} parent=0
    _
  %s10 = ssub.s32 1, %s8
  %s11 = scalar_select 0, %s10, %s8
  %v12 = vstv %s6
  %13 = vst [vmem:[#allocation2] sm:$0x1] %v12
  $region1: #{mlp_forward.1} parent=0
    #allocation3 [shape = 'u8[4096]{0}', space=vmem, size = 0x1000, scoped, tag = 'input window, operand 0, single buffered']
    #allocation4 [shape = 's32[1]{0}', space=sflag, size = 0x4, scoped, tag = 'scoped memory for mlp_forward.1']
    #allocation5 [shape = 'u8[16384]{0}', space=vmem, size = 0x4000, scoped, tag = 'input window, operand 1, single buffered']
    #allocation6 [shape = 's32[1]{0}', space=sflag, size = 0x4, scoped, tag = 'scoped memory for mlp_forward.1']
    #allocation7 [shape = 'u8[65536]{0}', space=vmem, size = 0x10000, scoped, tag = 'input window, operand 2, single buffered']
    #allocation8 [shape = 'u8[512]{0}', space=vmem, size = 0x400, scoped, tag = 'input window, operand 3, single buffered']
    #allocation9 [shape = 's32[1]{0}', space=sflag, size = 0x4, scoped, tag = 'scoped memory for mlp_forward.1']
    %14 = vsyncpa [#allocation4], 0
    %15 = vsyncpa [#allocation6], 0
    %16 = vsyncpa [#allocation9], 0
    // Predicated region
    $region2: #{mlp_forward.1} parent=1 // pred_check
      _
    $region3: #{mlp_forward.1} parent=1 // pred_check_branch
      %18 = sbr.rel (0) target = $region5
    $region4: #{mlp_forward.1} parent=1 // pred_region
      %20 = vsyncadd [#allocation4], 0
      %s22 = sshll.u32 %s0, 4
      %s23 = int_to_ptr.hbm [resolvable:$true] %s22
      %s24 = sshll.u32 [#allocation3], 4
      %s25 = int_to_ptr.vmem [resolvable:$true] %s24
      %27 = dma.hbm_to_vmem [thread:$0]  %s23, 128, %s25, [#allocation4]
    $region5: #{mlp_forward.1} parent=1 // pred_fallthru
      _
    // Predicated region
    $region6: #{mlp_forward.1} parent=1 // pred_check
      _
    $region7: #{mlp_forward.1} parent=1 // pred_check_branch
      %29 = sbr.rel (0) target = $region9
    $region8: #{mlp_forward.1} parent=1 // pred_region
      %31 = vsyncadd [#allocation6], 0
      %s32 = sshll.u32 %s1, 4
      %s33 = int_to_ptr.hbm [resolvable:$true] %s32
      %s34 = sshll.u32 [#allocation5], 4
      %s35 = int_to_ptr.vmem [resolvable:$true] %s34
      %40 = dma.hbm_to_vmem [thread:$0]  %s33, 512, %s35, [#allocation6], 128, 128, 8
    $region9: #{mlp_forward.1} parent=1 // pred_fallthru
      _
    // Predicated region
    $region10: #{mlp_forward.1} parent=1 // pred_check
      _
    $region11: #{mlp_forward.1} parent=1 // pred_check_branch
      %42 = sbr.rel (0) target = $region13
    $region12: #{mlp_forward.1} parent=1 // pred_region
      %44 = vsyncadd [#allocation6], 0
      %s45 = sshll.u32 %s2, 4
      %s46 = int_to_ptr.hbm [resolvable:$true] %s45
      %s47 = sshll.u32 [#allocation7], 4
      %s48 = int_to_ptr.vmem [resolvable:$true] %s47
      %53 = dma.hbm_to_vmem [thread:$0]  %s46, 2048, %s48, [#allocation6], 128, 128, 8
    $region13: #{mlp_forward.1} parent=1 // pred_fallthru
      _
    // Predicated region
    $region14: #{mlp_forward.1} parent=1 // pred_check
      _
    $region15: #{mlp_forward.1} parent=1 // pred_check_branch
      %55 = sbr.rel (0) target = $region17
    $region16: #{mlp_forward.1} parent=1 // pred_region
      %57 = vsyncadd [#allocation9], 0
      %s59 = sshll.u32 %s3, 4
      %s60 = int_to_ptr.hbm [resolvable:$true] %s59
      %s61 = sshll.u32 [#allocation8], 4
      %s62 = int_to_ptr.vmem [resolvable:$true] %s61
      %64 = dma.hbm_to_vmem [thread:$0]  %s60, 16, %s62, [#allocation9]
    $region17: #{mlp_forward.1} parent=1 // pred_fallthru
      _
    // Predicated region
    $region18: #{mlp_forward.1} parent=1 // pred_check
      _
    $region19: #{mlp_forward.1} parent=1 // pred_check_branch
      %66 = sbr.rel (0) target = $region21
    $region20: #{mlp_forward.1} parent=1 // pred_region
      _
    $region21: #{mlp_forward.1} parent=1 // pred_fallthru
      _
    // Predicated region
    $region22: #{mlp_forward.1} parent=1 // pred_check
      _
    $region23: #{mlp_forward.1} parent=1 // pred_check_branch
      %68 = sbr.rel (0) target = $region25
    $region24: #{mlp_forward.1} parent=1 // pred_region
      _
    $region25: #{mlp_forward.1} parent=1 // pred_fallthru
      _
    // Predicated region
    $region26: #{mlp_forward.1} parent=1 // pred_check
      _
    $region27: #{mlp_forward.1} parent=1 // pred_check_branch
      %70 = sbr.rel (0) target = $region29
    $region28: #{mlp_forward.1} parent=1 // pred_region
      _
    $region29: #{mlp_forward.1} parent=1 // pred_fallthru
      _
    // Predicated region
    $region30: #{mlp_forward.1} parent=1 // pred_check
      _
    $region31: #{mlp_forward.1} parent=1 // pred_check_branch
      %72 = sbr.rel (0) target = $region33
    $region32: #{mlp_forward.1} parent=1 // pred_region
      %74 = dma.done [#allocation4], 128
    $region33: #{mlp_forward.1} parent=1 // pred_fallthru
      _
    // Predicated region
    $region34: #{mlp_forward.1} parent=1 // pred_check
      _
    $region35: #{mlp_forward.1} parent=1 // pred_check_branch
      %76 = sbr.rel (0) target = $region37
    $region36: #{mlp_forward.1} parent=1 // pred_region
      %78 = dma.done [#allocation6], 512
    $region37: #{mlp_forward.1} parent=1 // pred_fallthru
      _
    // Predicated region
    $region38: #{mlp_forward.1} parent=1 // pred_check
      _
    $region39: #{mlp_forward.1} parent=1 // pred_check_branch
      %80 = sbr.rel (0) target = $region41
    $region40: #{mlp_forward.1} parent=1 // pred_region
      %82 = dma.done [#allocation6], 2048
    $region41: #{mlp_forward.1} parent=1 // pred_fallthru
      _
    // Predicated region
    $region42: #{mlp_forward.1} parent=1 // pred_check
      _
    $region43: #{mlp_forward.1} parent=1 // pred_check_branch
      %84 = sbr.rel (0) target = $region45
    $region44: #{mlp_forward.1} parent=1 // pred_region
      %86 = dma.done [#allocation9], 16
    $region45: #{mlp_forward.1} parent=1 // pred_fallthru
      _
    %v87 = vld [vmem:[#allocation3] sm:$0xff]
    %v88 = vld [vmem:[#allocation5] sm:$0xff]
    %v89 = vld [vmem:[#allocation5 + $0x8] sm:$0xff]
    %v90 = vld [vmem:[#allocation5 + $0x10] sm:$0xff]
    %v91 = vld [vmem:[#allocation5 + $0x18] sm:$0xff]
    %v92 = vld [vmem:[#allocation8] sm:$0x1]
    %v94 = vperm.slane %v92, 0
    %vm96 = vcmask 261120
    %v98 = vsel %vm96, %v87, 0
    %100 = vmatpush.msra.mxu0 0.0
    %101 = vmatpush.msra.mxu0 0.0
    %102 = vmatpush.msra.mxu0 0.0
    %103 = vmatpush.msra.mxu0 0.0
    %104 = vmatpush.msra.mxu0 0.0
    %105 = vmatpush.msra.mxu0 0.0
    %106 = vmatpush.msra.mxu0 0.0
    %107 = vmatpush.msra.mxu0 0.0
    %108 = vmatpush.msra.mxu0 0.0
    %109 = vmatpush.msra.mxu0 0.0
    %110 = vmatpush.msra.mxu0 0.0
    %111 = vmatpush.msra.mxu0 0.0
    %112 = vmatpush.msra.mxu0 %v91
    %113 = vmatpush.msra.mxu0 %v90
    %114 = vmatpush.msra.mxu0 %v89
    %115 = vmatpush.msra.mxu0 %v88
    %116 = vmatmul.f32.gmra.mxu0 %v98
    %v117 = vpop.f32.mrf.mxu0
    %v118 = vadd.f32 %v94, %v117
    %119 = vdwg.mxu0
    %v120 = vmax.f32 %v118, 0.0
    %v121 = vld [vmem:[#allocation7] sm:$0xff]
    %v122 = vld [vmem:[#allocation7 + $0x8] sm:$0xff]
    %v123 = vld [vmem:[#allocation7 + $0x10] sm:$0xff]
    %v124 = vld [vmem:[#allocation7 + $0x18] sm:$0xff]
    %v125 = vld [vmem:[#allocation7 + $0x20] sm:$0xff]
    %v126 = vld [vmem:[#allocation7 + $0x28] sm:$0xff]
    %v127 = vld [vmem:[#allocation7 + $0x30] sm:$0xff]
    %v128 = vld [vmem:[#allocation7 + $0x38] sm:$0xff]
    %v129 = vld [vmem:[#allocation7 + $0x40] sm:$0xff]
    %v130 = vld [vmem:[#allocation7 + $0x48] sm:$0xff]
    %v131 = vld [vmem:[#allocation7 + $0x50] sm:$0xff]
    %v132 = vld [vmem:[#allocation7 + $0x58] sm:$0xff]
    %v133 = vld [vmem:[#allocation7 + $0x60] sm:$0xff]
    %v134 = vld [vmem:[#allocation7 + $0x68] sm:$0xff]
    %v135 = vld [vmem:[#allocation7 + $0x70] sm:$0xff]
    %v136 = vld [vmem:[#allocation7 + $0x78] sm:$0xff]
    %v137 = vld [vmem:[%s4] sm:$0x1]
    %v139 = vperm.slane %v137, 0
    %141 = vmatpush.msra.mxu0 %v136
    %142 = vmatpush.msra.mxu0 %v135
    %143 = vmatpush.msra.mxu0 %v134
    %144 = vmatpush.msra.mxu0 %v133
    %145 = vmatpush.msra.mxu0 %v132
    %146 = vmatpush.msra.mxu0 %v131
    %147 = vmatpush.msra.mxu0 %v130
    %148 = vmatpush.msra.mxu0 %v129
    %149 = vmatpush.msra.mxu0 %v128
    %150 = vmatpush.msra.mxu0 %v127
    %151 = vmatpush.msra.mxu0 %v126
    %152 = vmatpush.msra.mxu0 %v125
    %153 = vmatpush.msra.mxu0 %v124
    %154 = vmatpush.msra.mxu0 %v123
    %155 = vmatpush.msra.mxu0 %v122
    %156 = vmatpush.msra.mxu0 %v121
    %157 = vmatmul.f32.gmra.mxu0 %v120
    %v158 = vpop.f32.mrf.mxu0
    %v159 = vadd.f32 %v139, %v158
    %160 = vdwg.mxu0
    %v161 = vmax.f32 %v159, 0.0
    %v162 = vld [vmem:[%s5] sm:$0x1]
    %v164 = vperm.slane %v162, 0
    %v166 = vmul.f32 %v161, %v164
    %167 = vadd.xlane.f32.xlu0 %v166
    %v168 = vpop.xlane.xlu0 %167
    %v169 = vld [vmem:[#allocation2] sm:$0x1]
    %v171 = vperm.slane %v169, 0
    %v173 = vadd.f32 %v168, %v171
    %vm174 = vcmask 7168
    %175 = vst.msk [vmem:[%s7] sm:$0xff] %vm174, %v173
    // Predicated region
    $region46: #{mlp_forward.1} parent=1 // pred_check
      _
    $region47: #{mlp_forward.1} parent=1 // pred_check_branch
      %177 = sbr.rel (0) target = $region49
    $region48: #{mlp_forward.1} parent=1 // pred_region
      _
    $region49: #{mlp_forward.1} parent=1 // pred_fallthru
      _
    // Predicated region
    $region50: #{mlp_forward.1} parent=1 // pred_check
      _
    $region51: #{mlp_forward.1} parent=1 // pred_check_branch
      %179 = sbr.rel (0) target = $region53
    $region52: #{mlp_forward.1} parent=1 // pred_region
      _
    $region53: #{mlp_forward.1} parent=1 // pred_fallthru
      _
    %180 = vsyncpa [#allocation4], 1
    %181 = vsyncpa [#allocation6], 1
    %182 = vsyncpa [#allocation9], 1

</llo_original>
